<compile_context>
chip_gen: v7x
topology: tpu7x:2x2x1
jax: 0.10.0
libtpu: 0.0.40
codegen_flags: <defaults>
</compile_context>

<pallas_src>
import functools

import jax
import jax.numpy as jnp
from jax.experimental import pallas as pl
from jax.experimental.pallas import tpu as pltpu


def _round_up(n, m):
    return pl.cdiv(n, m) * m


def _mlp_kernel(x_ref, w1_ref, wh_ref, w6_ref, b_ref, o_ref, *, compute_dtype):
    # x_ref : (tile, J)      input activations tile
    # w1_ref: (J, 64)        first-layer weight (in, out), compute_dtype
    # wh_ref: (4, 64, 64)    hidden-layer weights, compute_dtype
    # w6_ref: (1, 64)        final-layer weight as a row, float32
    # b_ref : (6, 64)        biases; row 5 holds the scalar final bias in col 0
    # o_ref : (tile, 1)      output logits
    x = x_ref[...].astype(compute_dtype)

    # Layer 1: J -> 64 (MXU), f32 accumulation.
    h = jnp.dot(x, w1_ref[...], preferred_element_type=jnp.float32)
    h = jnp.maximum(h + b_ref[0:1, :], 0.0)

    # Layers 2..5: 64 -> 64, statically unrolled.
    for l in range(4):
        h = jnp.dot(h.astype(compute_dtype), wh_ref[l],
                    preferred_element_type=jnp.float32)
        h = jnp.maximum(h + b_ref[l + 1:l + 2, :], 0.0)

    # Layer 6: 64 -> 1. N=1 matmul replaced with a VPU multiply + lane
    # reduction (XLU slot, otherwise idle here) instead of burning an MXU pass.
    out = jnp.sum(h * w6_ref[...], axis=-1, keepdims=True) + b_ref[5:6, 0:1]
    o_ref[...] = out.astype(o_ref.dtype)


def robot_collision_net(centers, params, *, batch_tile=256,
                        compute_dtype=jnp.float32):
    """Fused RobotCollisionNet forward pass.

    centers: (B, num_joints) float32
    params:  list of 6 (W, b) pairs; W is (in, out), b is (1, out).
    """
    B, J = centers.shape
    assert len(params) == 6

    # MXU-friendly tile: multiple of 8 (f32 sublanes). Shrink for tiny batches
    # so we don't pad e.g. B=16 all the way up to 256.
    batch_tile = int(_round_up(batch_tile, 8))
    tile = min(batch_tile, int(_round_up(B, 8)))
    B_pad = int(_round_up(B, tile))
    grid = B_pad // tile

    x = centers
    if B_pad != B:
        x = jnp.pad(x, ((0, B_pad - B), (0, 0)))

    # ---- pack parameters into 4 grid-invariant VMEM inputs ------------------
    w1 = params[0][0].astype(compute_dtype)                             # (J, 64)
    wh = jnp.stack([params[i][0] for i in range(1, 5)], axis=0)         # (4,64,64)
    wh = wh.astype(compute_dtype)
    w6 = params[5][0].reshape(1, 64).astype(jnp.float32)                # (1, 64)

    b_rows = [params[i][1].reshape(-1).astype(jnp.float32) for i in range(5)]
    b_last = jnp.zeros((64,), jnp.float32).at[0].set(
        params[5][1].reshape(-1)[0].astype(jnp.float32))
    b = jnp.stack(b_rows + [b_last], axis=0)                            # (6, 64)

    kernel = functools.partial(_mlp_kernel, compute_dtype=compute_dtype)

    out = pl.pallas_call(
        kernel,
        out_shape=jax.ShapeDtypeStruct((B_pad, 1), jnp.float32),
        grid_spec=pltpu.PrefetchScalarGridSpec(
            num_scalar_prefetch=0,
            grid=(grid,),
            in_specs=[
                pl.BlockSpec((tile, J), lambda i: (i, 0)),
                pl.BlockSpec(w1.shape, lambda i: (0, 0)),
                pl.BlockSpec(wh.shape, lambda i: (0, 0, 0)),
                pl.BlockSpec(w6.shape, lambda i: (0, 0)),
                pl.BlockSpec(b.shape, lambda i: (0, 0)),
            ],
            out_specs=pl.BlockSpec((tile, 1), lambda i: (i, 0)),
        ),
        compiler_params=pltpu.CompilerParams(
            dimension_semantics=("parallel",)),
    )(x, w1, wh, w6, b)

    return out[:B]


def init_params(num_joints, key):
    """Deterministic PyTorch-Linear-style init (uniform(+-1/sqrt(fan_in)))."""
    dims = [num_joints, 64, 64, 64, 64, 64, 1]
    params = []
    for i in range(len(dims) - 1):
        fan_in, fan_out = dims[i], dims[i + 1]
        key, kw, kb = jax.random.split(key, 3)
        bound = 1.0 / jnp.sqrt(jnp.float32(fan_in))
        w = jax.random.uniform(kw, (fan_in, fan_out), jnp.float32, -bound, bound)
        b = jax.random.uniform(kb, (1, fan_out), jnp.float32, -bound, bound)
        params.append((w, b))
    return params


def reference_forward(centers, params):
    h = centers
    for i, (w, b) in enumerate(params):
        h = jnp.dot(h, w, precision=jax.lax.Precision.HIGHEST) + b
        if i < len(params) - 1:
            h = jnp.maximum(h, 0.0)
    return h


if __name__ == "__main__":
    num_joints = 7   # e.g. a 7-DoF arm
    batch = 16

    key = jax.random.PRNGKey(0)
    key, kx = jax.random.split(key)
    centers = jax.random.normal(kx, (batch, num_joints), jnp.float32)
    params = init_params(num_joints, key)

    # f32 path (exact PyTorch-equivalent semantics).
    out = robot_collision_net(centers, params, batch_tile=256)
    out = jax.block_until_ready(out)
    ref = reference_forward(centers, params)
    assert out.shape == (batch, 1)
    assert jnp.allclose(out, ref, atol=1e-4, rtol=1e-4), "f32 mismatch vs ref"

    # Ragged batch + bf16-matmul path (f32 accumulation).
    batch2 = 19
    centers2 = jax.random.normal(jax.random.PRNGKey(1), (batch2, num_joints),
                                 jnp.float32)
    out2 = robot_collision_net(centers2, params, batch_tile=256,
                               compute_dtype=jnp.bfloat16)
    out2 = jax.block_until_ready(out2)
    ref2 = reference_forward(centers2, params)
    assert out2.shape == (batch2, 1)
    assert jnp.allclose(out2, ref2, atol=5e-2, rtol=5e-2), "bf16 mismatch vs ref"

    print("KERNEL_OK")
</pallas_src>

<mosaic_0001>
module attributes {stable_mosaic.version = 11 : i64} {
  func.func @_mlp_kernel(%arg0: i32, %arg1: memref<16x7xf32, #tpu.memory_space<vmem>>, %arg2: memref<7x64xf32, #tpu.memory_space<vmem>>, %arg3: memref<4x64x64xf32, #tpu.memory_space<vmem>>, %arg4: memref<1x64xf32, #tpu.memory_space<vmem>>, %arg5: memref<6x64xf32, #tpu.memory_space<vmem>>, %arg6: memref<16x1xf32, #tpu.memory_space<vmem>>) attributes {dimension_semantics = [#tpu.dimension_semantics<parallel>], iteration_bounds = array<i64: 1>, scalar_prefetch = 0 : i64, scratch_operands = 0 : i64, tpu.core_type = #tpu.core_type<tc>, window_params = [{transform_indices = @transform_0, window_bounds = array<i64: 16, 7>}, {pipeline_mode = #tpu.pipeline_mode<synchronous>, transform_indices = @transform_1, window_bounds = array<i64: 7, 64>}, {pipeline_mode = #tpu.pipeline_mode<synchronous>, transform_indices = @transform_2, window_bounds = array<i64: 4, 64, 64>}, {pipeline_mode = #tpu.pipeline_mode<synchronous>, transform_indices = @transform_3, window_bounds = array<i64: 1, 64>}, {pipeline_mode = #tpu.pipeline_mode<synchronous>, transform_indices = @transform_4, window_bounds = array<i64: 6, 64>}, {transform_indices = @transform_5, window_bounds = array<i64: 16, 1>}]} {
    %c0 = arith.constant 0 : index
    %c0_0 = arith.constant 0 : index
    %0 = vector.load %arg1[%c0, %c0_0] : memref<16x7xf32, #tpu.memory_space<vmem>>, vector<16x7xf32>
    %c0_1 = arith.constant 0 : index
    %c0_2 = arith.constant 0 : index
    %1 = vector.load %arg2[%c0_1, %c0_2] : memref<7x64xf32, #tpu.memory_space<vmem>>, vector<7x64xf32>
    %cst = arith.constant dense<0.000000e+00> : vector<16x64xf32>
    %2 = tpu.matmul %0, %1, %cst {dimension_numbers = #tpu.dot_dimension_numbers<[1], [0], [0], [1], [0, 0, 1, 1], [], []>} : vector<16x7xf32>, vector<7x64xf32>, vector<16x64xf32> -> vector<16x64xf32>
    %c0_3 = arith.constant 0 : index
    %c0_4 = arith.constant 0 : index
    %3 = vector.load %arg5[%c0_3, %c0_4] : memref<6x64xf32, #tpu.memory_space<vmem>>, vector<1x64xf32>
    %4 = vector.broadcast %3 : vector<1x64xf32> to vector<16x64xf32>
    %5 = arith.addf %2, %4 : vector<16x64xf32>
    %cst_5 = arith.constant 0.000000e+00 : f32
    %6 = vector.broadcast %cst_5 : f32 to vector<16x64xf32>
    %7 = arith.maximumf %5, %6 : vector<16x64xf32>
    %c0_6 = arith.constant 0 : index
    %c0_7 = arith.constant 0 : index
    %c0_8 = arith.constant 0 : index
    %8 = vector.load %arg3[%c0_6, %c0_7, %c0_8] : memref<4x64x64xf32, #tpu.memory_space<vmem>>, vector<1x64x64xf32>
    %9 = vector.shape_cast %8 : vector<1x64x64xf32> to vector<64x64xf32>
    %cst_9 = arith.constant dense<0.000000e+00> : vector<16x64xf32>
    %10 = tpu.matmul %7, %9, %cst_9 {dimension_numbers = #tpu.dot_dimension_numbers<[1], [0], [0], [1], [0, 0, 1, 1], [], []>} : vector<16x64xf32>, vector<64x64xf32>, vector<16x64xf32> -> vector<16x64xf32>
    %c1 = arith.constant 1 : index
    %c0_10 = arith.constant 0 : index
    %11 = vector.load %arg5[%c1, %c0_10] : memref<6x64xf32, #tpu.memory_space<vmem>>, vector<1x64xf32>
    %12 = vector.broadcast %11 : vector<1x64xf32> to vector<16x64xf32>
    %13 = arith.addf %10, %12 : vector<16x64xf32>
    %cst_11 = arith.constant 0.000000e+00 : f32
    %14 = vector.broadcast %cst_11 : f32 to vector<16x64xf32>
    %15 = arith.maximumf %13, %14 : vector<16x64xf32>
    %c1_12 = arith.constant 1 : index
    %c0_13 = arith.constant 0 : index
    %c0_14 = arith.constant 0 : index
    %16 = vector.load %arg3[%c1_12, %c0_13, %c0_14] : memref<4x64x64xf32, #tpu.memory_space<vmem>>, vector<1x64x64xf32>
    %17 = vector.shape_cast %16 : vector<1x64x64xf32> to vector<64x64xf32>
    %cst_15 = arith.constant dense<0.000000e+00> : vector<16x64xf32>
    %18 = tpu.matmul %15, %17, %cst_15 {dimension_numbers = #tpu.dot_dimension_numbers<[1], [0], [0], [1], [0, 0, 1, 1], [], []>} : vector<16x64xf32>, vector<64x64xf32>, vector<16x64xf32> -> vector<16x64xf32>
    %c2 = arith.constant 2 : index
    %c0_16 = arith.constant 0 : index
    %19 = vector.load %arg5[%c2, %c0_16] : memref<6x64xf32, #tpu.memory_space<vmem>>, vector<1x64xf32>
    %20 = vector.broadcast %19 : vector<1x64xf32> to vector<16x64xf32>
    %21 = arith.addf %18, %20 : vector<16x64xf32>
    %cst_17 = arith.constant 0.000000e+00 : f32
    %22 = vector.broadcast %cst_17 : f32 to vector<16x64xf32>
    %23 = arith.maximumf %21, %22 : vector<16x64xf32>
    %c2_18 = arith.constant 2 : index
    %c0_19 = arith.constant 0 : index
    %c0_20 = arith.constant 0 : index
    %24 = vector.load %arg3[%c2_18, %c0_19, %c0_20] : memref<4x64x64xf32, #tpu.memory_space<vmem>>, vector<1x64x64xf32>
    %25 = vector.shape_cast %24 : vector<1x64x64xf32> to vector<64x64xf32>
    %cst_21 = arith.constant dense<0.000000e+00> : vector<16x64xf32>
    %26 = tpu.matmul %23, %25, %cst_21 {dimension_numbers = #tpu.dot_dimension_numbers<[1], [0], [0], [1], [0, 0, 1, 1], [], []>} : vector<16x64xf32>, vector<64x64xf32>, vector<16x64xf32> -> vector<16x64xf32>
    %c3 = arith.constant 3 : index
    %c0_22 = arith.constant 0 : index
    %27 = vector.load %arg5[%c3, %c0_22] : memref<6x64xf32, #tpu.memory_space<vmem>>, vector<1x64xf32>
    %28 = vector.broadcast %27 : vector<1x64xf32> to vector<16x64xf32>
    %29 = arith.addf %26, %28 : vector<16x64xf32>
    %cst_23 = arith.constant 0.000000e+00 : f32
    %30 = vector.broadcast %cst_23 : f32 to vector<16x64xf32>
    %31 = arith.maximumf %29, %30 : vector<16x64xf32>
    %c3_24 = arith.constant 3 : index
    %c0_25 = arith.constant 0 : index
    %c0_26 = arith.constant 0 : index
    %32 = vector.load %arg3[%c3_24, %c0_25, %c0_26] : memref<4x64x64xf32, #tpu.memory_space<vmem>>, vector<1x64x64xf32>
    %33 = vector.shape_cast %32 : vector<1x64x64xf32> to vector<64x64xf32>
    %cst_27 = arith.constant dense<0.000000e+00> : vector<16x64xf32>
    %34 = tpu.matmul %31, %33, %cst_27 {dimension_numbers = #tpu.dot_dimension_numbers<[1], [0], [0], [1], [0, 0, 1, 1], [], []>} : vector<16x64xf32>, vector<64x64xf32>, vector<16x64xf32> -> vector<16x64xf32>
    %c4 = arith.constant 4 : index
    %c0_28 = arith.constant 0 : index
    %35 = vector.load %arg5[%c4, %c0_28] : memref<6x64xf32, #tpu.memory_space<vmem>>, vector<1x64xf32>
    %36 = vector.broadcast %35 : vector<1x64xf32> to vector<16x64xf32>
    %37 = arith.addf %34, %36 : vector<16x64xf32>
    %cst_29 = arith.constant 0.000000e+00 : f32
    %38 = vector.broadcast %cst_29 : f32 to vector<16x64xf32>
    %39 = arith.maximumf %37, %38 : vector<16x64xf32>
    %c0_30 = arith.constant 0 : index
    %c0_31 = arith.constant 0 : index
    %40 = vector.load %arg4[%c0_30, %c0_31] : memref<1x64xf32, #tpu.memory_space<vmem>>, vector<1x64xf32>
    %41 = vector.broadcast %40 : vector<1x64xf32> to vector<16x64xf32>
    %42 = arith.mulf %39, %41 : vector<16x64xf32>
    %cst_32 = arith.constant dense<0.000000e+00> : vector<16xf32>
    %43 = vector.multi_reduction <add>, %42, %cst_32 [1] : vector<16x64xf32> to vector<16xf32>
    %44 = vector.shape_cast %43 : vector<16xf32> to vector<16x1xf32>
    %c5 = arith.constant 5 : index
    %c0_33 = arith.constant 0 : index
    %45 = vector.load %arg5[%c5, %c0_33] : memref<6x64xf32, #tpu.memory_space<vmem>>, vector<1x1xf32>
    %46 = vector.broadcast %45 : vector<1x1xf32> to vector<16x1xf32>
    %47 = arith.addf %44, %46 : vector<16x1xf32>
    %c0_34 = arith.constant 0 : index
    %c0_35 = arith.constant 0 : index
    %48 = vector.load %arg6[%c0_34, %c0_35] : memref<16x1xf32, #tpu.memory_space<vmem>>, vector<16x1xf32>
    tpu.vector_store %arg6[%c0_34, %c0_35], %47 {strides = array<i32>} : memref<16x1xf32, #tpu.memory_space<vmem>>, vector<16x1xf32>,
    return
  }
  func.func @transform_0(%arg0: i32) -> (i32, i32) {
    %c0_i32 = arith.constant 0 : i32
    %c0_i32_0 = arith.constant 0 : i32
    return %arg0, %c0_i32 : i32, i32
  }
  func.func @transform_1(%arg0: i32) -> (i32, i32) {
    %c0_i32 = arith.constant 0 : i32
    %c0_i32_0 = arith.constant 0 : i32
    %c0_i32_1 = arith.constant 0 : i32
    return %c0_i32, %c0_i32_0 : i32, i32
  }
  func.func @transform_2(%arg0: i32) -> (i32, i32, i32) {
    %c0_i32 = arith.constant 0 : i32
    %c0_i32_0 = arith.constant 0 : i32
    %c0_i32_1 = arith.constant 0 : i32
    %c0_i32_2 = arith.constant 0 : i32
    return %c0_i32, %c0_i32_0, %c0_i32_1 : i32, i32, i32
  }
  func.func @transform_3(%arg0: i32) -> (i32, i32) {
    %c0_i32 = arith.constant 0 : i32
    %c0_i32_0 = arith.constant 0 : i32
    %c0_i32_1 = arith.constant 0 : i32
    return %c0_i32, %c0_i32_0 : i32, i32
  }
  func.func @transform_4(%arg0: i32) -> (i32, i32) {
    %c0_i32 = arith.constant 0 : i32
    %c0_i32_0 = arith.constant 0 : i32
    %c0_i32_1 = arith.constant 0 : i32
    return %c0_i32, %c0_i32_0 : i32, i32
  }
  func.func @transform_5(%arg0: i32) -> (i32, i32) {
    %c0_i32 = arith.constant 0 : i32
    %c0_i32_0 = arith.constant 0 : i32
    return %arg0, %c0_i32 : i32, i32
  }
}

</mosaic_0001>

<llo_original>
// kernel: tpu_custom_call.1
$region0: #{tpu_custom_call.1}
  #allocation0 [shape = 'u32[]', space=smem, size = 0x4, offset = 0x4, fixed_abs, tag = 'smem constant byte address 0x4 - core index']
  #allocation1 [shape = 'u32[144,128]{1,0:T(1,128)}', space=vmem, size = 0x12000, scoped, tag = 'internal scratch']
  %s0 = inlined_call_operand.vmem [shape: f32[16,7], index: 0, kind: input, shape index: {}]
  %s1 = inlined_call_operand.vmem [shape: f32[7,64], index: 1, kind: input, shape index: {}]
  %s2 = inlined_call_operand.hbm [shape: f32[4,64,64], index: 2, kind: input, shape index: {}]
  %s3 = inlined_call_operand.vmem [shape: f32[1,64], index: 3, kind: input, shape index: {}]
  %s4 = inlined_call_operand.vmem [shape: f32[6,64], index: 4, kind: input, shape index: {}]
  %s5 = inlined_call_operand.vmem [shape: f32[16,1], index: 5, kind: output, shape index: {}]
  %s6 = sld [smem:[#allocation0]]
  $region34: #{tpu_custom_call.1} parent=0
    _
  %s8 = ssub.s32 1, %s6
  %s9 = scalar_select 0, %s8, %s6
  $region1: #{tpu_custom_call.1} parent=0
    #allocation2 [shape = 'u8[131072]{0}', space=vmem, size = 0x20000, scoped, tag = 'input window, operand 2, single buffered']
    #allocation3 [shape = 's32[1]{0}', space=sflag, size = 0x4, scoped, tag = 'scoped memory for tpu_custom_call.1']
    %10 = vsyncpa [#allocation3], 0
    // Predicated region
    $region2: #{tpu_custom_call.1} parent=1 // pred_check
      _
    $region3: #{tpu_custom_call.1} parent=1 // pred_check_branch
      %12 = sbr.rel (0) target = $region5
    $region4: #{tpu_custom_call.1} parent=1 // pred_region
      _
    $region5: #{tpu_custom_call.1} parent=1 // pred_fallthru
      _
    // Predicated region
    $region6: #{tpu_custom_call.1} parent=1 // pred_check
      _
    $region7: #{tpu_custom_call.1} parent=1 // pred_check_branch
      %14 = sbr.rel (0) target = $region9
    $region8: #{tpu_custom_call.1} parent=1 // pred_region
      _
    $region9: #{tpu_custom_call.1} parent=1 // pred_fallthru
      _
    // Predicated region
    $region10: #{tpu_custom_call.1} parent=1 // pred_check
      _
    $region11: #{tpu_custom_call.1} parent=1 // pred_check_branch
      %16 = sbr.rel (0) target = $region13
    $region12: #{tpu_custom_call.1} parent=1 // pred_region
      %s18 = ssub.s32 4096, 4096
      %19 = vsyncadd [#allocation3], %s18
      %s20 = sshll.u32 [#allocation2], 4
      %s21 = int_to_ptr.vmem [resolvable:$true] %s20
      %26 = dma.hbm_to_vmem [thread:$0]  %s2, 4096, %s21, [#allocation3], 128, 128, 8
    $region13: #{tpu_custom_call.1} parent=1 // pred_fallthru
      _
    // Predicated region
    $region14: #{tpu_custom_call.1} parent=1 // pred_check
      _
    $region15: #{tpu_custom_call.1} parent=1 // pred_check_branch
      %28 = sbr.rel (0) target = $region17
    $region16: #{tpu_custom_call.1} parent=1 // pred_region
      _
    $region17: #{tpu_custom_call.1} parent=1 // pred_fallthru
      _
    // Predicated region
    $region18: #{tpu_custom_call.1} parent=1 // pred_check
      _
    $region19: #{tpu_custom_call.1} parent=1 // pred_check_branch
      %30 = sbr.rel (0) target = $region21
    $region20: #{tpu_custom_call.1} parent=1 // pred_region
      _
    $region21: #{tpu_custom_call.1} parent=1 // pred_fallthru
      _
    // Predicated region
    $region22: #{tpu_custom_call.1} parent=1 // pred_check
      _
    $region23: #{tpu_custom_call.1} parent=1 // pred_check_branch
      %32 = sbr.rel (0) target = $region25
    $region24: #{tpu_custom_call.1} parent=1 // pred_region
      %33 = dma.done [#allocation3], 4096
    $region25: #{tpu_custom_call.1} parent=1 // pred_fallthru
      _
    %v34 = vld [vmem:[%s0] sm:$0xff]
    %v35 = vld [vmem:[%s0 + $0x8] sm:$0xff]
    %v36 = vld [vmem:[%s1] sm:$0x7f]
    %v37 = vld [vmem:[%s4] sm:$0x1]
    %v38 = vlaneseq
    %v39 = vshrl.u32 %v38, 7
    %v40 = vsub.s32 0, %v39
    %v41 = vrot.slane %v37, %v40
    %vm42 = vcmask 56320
    %v44 = vsel %vm42, %v34, 0
    %v47 = vsel %vm42, %v35, 0
    %vm49 = vcmask 1046528
    %v51 = vsel %vm49, %v36, 0
    %53 = vmatprep.subr.mxu0 0.0
    %54 = vmatpush1.msra.mxu0 %v51
    %55 = vmatprep.subr.mxu0 0.0
    %56 = vmatpush1.msra.mxu0 0.0
    %57 = vmatprep.subr.mxu0 0.0
    %58 = vmatpush1.msra.mxu0 0.0
    %59 = vmatprep.subr.mxu0 0.0
    %60 = vmatpush1.msra.mxu0 0.0
    %61 = vmatprep.subr.mxu0 0.0
    %62 = vmatpush1.msra.mxu0 0.0
    %63 = vmatprep.subr.mxu0 0.0
    %64 = vmatpush1.msra.mxu0 0.0
    %65 = vmatprep.subr.mxu0 0.0
    %66 = vmatpush1.msra.mxu0 0.0
    %67 = vmatprep.subr.mxu0 0.0
    %68 = vmatpush1.msra.mxu0 0.0
    %69 = vmatprep.subr.mxu0 0.0
    %70 = vmatpush1.msra.mxu0 0.0
    %71 = vmatprep.subr.mxu0 0.0
    %72 = vmatpush1.msra.mxu0 0.0
    %73 = vmatprep.subr.mxu0 0.0
    %74 = vmatpush1.msra.mxu0 0.0
    %75 = vmatprep.subr.mxu0 0.0
    %76 = vmatpush1.msra.mxu0 0.0
    %77 = vmatprep.subr.mxu0 0.0
    %78 = vmatpush1.msra.mxu0 0.0
    %79 = vmatprep.subr.mxu0 0.0
    %80 = vmatpush1.msra.mxu0 0.0
    %81 = vmatprep.subr.mxu0 0.0
    %82 = vmatpush1.msra.mxu0 0.0
    %83 = vmatprep.subr.mxu0 0.0
    %84 = vmatpush1.msra.mxu0 0.0
    %85 = vmatprep.subr.mxu0 0.0
    %86 = vmatpush1.msra.mxu0 0.0
    %87 = vmatprep.subr.mxu0 0.0
    %88 = vmatpush1.msra.mxu0 0.0
    %89 = vmatprep.subr.mxu0 0.0
    %90 = vmatpush1.msra.mxu0 0.0
    %91 = vmatprep.subr.mxu0 0.0
    %92 = vmatpush1.msra.mxu0 0.0
    %93 = vmatprep.subr.mxu0 0.0
    %94 = vmatpush1.msra.mxu0 0.0
    %95 = vmatprep.subr.mxu0 0.0
    %96 = vmatpush1.msra.mxu0 0.0
    %97 = vmatprep.subr.mxu0 0.0
    %98 = vmatpush1.msra.mxu0 0.0
    %99 = vmatprep.subr.mxu0 0.0
    %100 = vmatpush1.msra.mxu0 0.0
    %101 = vmatprep.subr.mxu0 0.0
    %102 = vmatpush1.msra.mxu0 0.0
    %103 = vmatprep.subr.mxu0 0.0
    %104 = vmatpush1.msra.mxu0 0.0
    %105 = vmatprep.subr.mxu0 0.0
    %106 = vmatpush1.msra.mxu0 0.0
    %107 = vmatprep.subr.mxu0 0.0
    %108 = vmatpush1.msra.mxu0 0.0
    %109 = vmatprep.subr.mxu0 0.0
    %110 = vmatpush1.msra.mxu0 0.0
    %111 = vmatprep.subr.mxu0 0.0
    %112 = vmatpush1.msra.mxu0 0.0
    %113 = vmatprep.subr.mxu0 0.0
    %114 = vmatpush1.msra.mxu0 0.0
    %115 = vmatprep.subr.mxu0 0.0
    %116 = vmatpush1.msra.mxu0 0.0
    %117 = vmatprep.mubr.f32.mxu0 0.0
    %118 = vmatmul.mubr.f32.gmra.mrb[0].mxu0 %v44
    %v119 = vpop.f32.mrb[0].mxu0
    %v120 = vadd.f32 %v41, %v119
    %v121 = vpop.f32.mrb[0].mxu0
    %122 = vmatprep.mubr.f32.mxu0 0.0
    %123 = vmatmul.mubr.f32.gmra.mrb[0].mxu0 %v47
    %v124 = vpop.f32.mrb[0].mxu0
    %v125 = vadd.f32 %v41, %v124
    %v126 = vpop.f32.mrb[0].mxu0
    %127 = vdwg.mxu0
    %v128 = vmax.f32 %v120, 0.0
    %v129 = vmax.f32 %v125, 0.0
    %v130 = vld [vmem:[#allocation2] sm:$0xff]
    %v131 = vld [vmem:[#allocation2 + $0x8] sm:$0xff]
    %v132 = vld [vmem:[#allocation2 + $0x10] sm:$0xff]
    %v133 = vld [vmem:[#allocation2 + $0x18] sm:$0xff]
    %v134 = vld [vmem:[#allocation2 + $0x20] sm:$0xff]
    %v135 = vld [vmem:[#allocation2 + $0x28] sm:$0xff]
    %v136 = vld [vmem:[#allocation2 + $0x30] sm:$0xff]
    %v137 = vld [vmem:[#allocation2 + $0x38] sm:$0xff]
    %v138 = vld [vmem:[%s4 + $0x1] sm:$0x1]
    %v139 = vlaneseq
    %v140 = vshrl.u32 %v139, 7
    %v141 = vsub.s32 0, %v140
    %v142 = vrot.slane %v138, %v141
    %vm143 = vcmask 523264
    %v145 = vsel %vm143, %v128, 0
    %v148 = vsel %vm143, %v129, 0
    %150 = vmatprep.subr.mxu0 0.0
    %151 = vmatpush1.msra.mxu0 %v130
    %152 = vmatprep.subr.mxu0 0.0
    %153 = vmatpush1.msra.mxu0 %v131
    %154 = vmatprep.subr.mxu0 0.0
    %155 = vmatpush1.msra.mxu0 %v132
    %156 = vmatprep.subr.mxu0 0.0
    %157 = vmatpush1.msra.mxu0 %v133
    %158 = vmatprep.subr.mxu0 0.0
    %159 = vmatpush1.msra.mxu0 %v134
    %160 = vmatprep.subr.mxu0 0.0
    %161 = vmatpush1.msra.mxu0 %v135
    %162 = vmatprep.subr.mxu0 0.0
    %163 = vmatpush1.msra.mxu0 %v136
    %164 = vmatprep.subr.mxu0 0.0
    %165 = vmatpush1.msra.mxu0 %v137
    %166 = vmatprep.subr.mxu0 0.0
    %167 = vmatpush1.msra.mxu0 0.0
    %168 = vmatprep.subr.mxu0 0.0
    %169 = vmatpush1.msra.mxu0 0.0
    %170 = vmatprep.subr.mxu0 0.0
    %171 = vmatpush1.msra.mxu0 0.0
    %172 = vmatprep.subr.mxu0 0.0
    %173 = vmatpush1.msra.mxu0 0.0
    %174 = vmatprep.subr.mxu0 0.0
    %175 = vmatpush1.msra.mxu0 0.0
    %176 = vmatprep.subr.mxu0 0.0
    %177 = vmatpush1.msra.mxu0 0.0
    %178 = vmatprep.subr.mxu0 0.0
    %179 = vmatpush1.msra.mxu0 0.0
    %180 = vmatprep.subr.mxu0 0.0
    %181 = vmatpush1.msra.mxu0 0.0
    %182 = vmatprep.subr.mxu0 0.0
    %183 = vmatpush1.msra.mxu0 0.0
    %184 = vmatprep.subr.mxu0 0.0
    %185 = vmatpush1.msra.mxu0 0.0
    %186 = vmatprep.subr.mxu0 0.0
    %187 = vmatpush1.msra.mxu0 0.0
    %188 = vmatprep.subr.mxu0 0.0
    %189 = vmatpush1.msra.mxu0 0.0
    %190 = vmatprep.subr.mxu0 0.0
    %191 = vmatpush1.msra.mxu0 0.0
    %192 = vmatprep.subr.mxu0 0.0
    %193 = vmatpush1.msra.mxu0 0.0
    %194 = vmatprep.subr.mxu0 0.0
    %195 = vmatpush1.msra.mxu0 0.0
    %196 = vmatprep.subr.mxu0 0.0
    %197 = vmatpush1.msra.mxu0 0.0
    %198 = vmatprep.subr.mxu0 0.0
    %199 = vmatpush1.msra.mxu0 0.0
    %200 = vmatprep.subr.mxu0 0.0
    %201 = vmatpush1.msra.mxu0 0.0
    %202 = vmatprep.subr.mxu0 0.0
    %203 = vmatpush1.msra.mxu0 0.0
    %204 = vmatprep.subr.mxu0 0.0
    %205 = vmatpush1.msra.mxu0 0.0
    %206 = vmatprep.subr.mxu0 0.0
    %207 = vmatpush1.msra.mxu0 0.0
    %208 = vmatprep.subr.mxu0 0.0
    %209 = vmatpush1.msra.mxu0 0.0
    %210 = vmatprep.subr.mxu0 0.0
    %211 = vmatpush1.msra.mxu0 0.0
    %212 = vmatprep.subr.mxu0 0.0
    %213 = vmatpush1.msra.mxu0 0.0
    %214 = vmatprep.mubr.f32.mxu0 0.0
    %215 = vmatmul.mubr.f32.gmra.mrb[0].mxu0 %v145
    %v216 = vpop.f32.mrb[0].mxu0
    %v217 = vadd.f32 %v142, %v216
    %v218 = vpop.f32.mrb[0].mxu0
    %219 = vmatprep.mubr.f32.mxu0 0.0
    %220 = vmatmul.mubr.f32.gmra.mrb[0].mxu0 %v148
    %v221 = vpop.f32.mrb[0].mxu0
    %v222 = vadd.f32 %v142, %v221
    %v223 = vpop.f32.mrb[0].mxu0
    %224 = vdwg.mxu0
    %v225 = vmax.f32 %v217, 0.0
    %v226 = vmax.f32 %v222, 0.0
    %s227 = scalar_lea.vmem [#allocation2], 64
    %v228 = vld [vmem:[%s227] sm:$0xff]
    %v229 = vld [vmem:[%s227 + $0x8] sm:$0xff]
    %v230 = vld [vmem:[%s227 + $0x10] sm:$0xff]
    %v231 = vld [vmem:[%s227 + $0x18] sm:$0xff]
    %v232 = vld [vmem:[%s227 + $0x20] sm:$0xff]
    %v233 = vld [vmem:[%s227 + $0x28] sm:$0xff]
    %v234 = vld [vmem:[%s227 + $0x30] sm:$0xff]
    %v235 = vld [vmem:[%s227 + $0x38] sm:$0xff]
    %v236 = vld [vmem:[%s4 + $0x2] sm:$0x1]
    %v237 = vlaneseq
    %v238 = vshrl.u32 %v237, 7
    %v239 = vsub.s32 0, %v238
    %v240 = vrot.slane %v236, %v239
    %v242 = vsel %vm143, %v225, 0
    %v245 = vsel %vm143, %v226, 0
    %247 = vmatprep.subr.mxu0 0.0
    %248 = vmatpush1.msra.mxu0 %v228
    %249 = vmatprep.subr.mxu0 0.0
    %250 = vmatpush1.msra.mxu0 %v229
    %251 = vmatprep.subr.mxu0 0.0
    %252 = vmatpush1.msra.mxu0 %v230
    %253 = vmatprep.subr.mxu0 0.0
    %254 = vmatpush1.msra.mxu0 %v231
    %255 = vmatprep.subr.mxu0 0.0
    %256 = vmatpush1.msra.mxu0 %v232
    %257 = vmatprep.subr.mxu0 0.0
    %258 = vmatpush1.msra.mxu0 %v233
    %259 = vmatprep.subr.mxu0 0.0
    %260 = vmatpush1.msra.mxu0 %v234
    %261 = vmatprep.subr.mxu0 0.0
    %262 = vmatpush1.msra.mxu0 %v235
    %263 = vmatprep.subr.mxu0 0.0
    %264 = vmatpush1.msra.mxu0 0.0
    %265 = vmatprep.subr.mxu0 0.0
    %266 = vmatpush1.msra.mxu0 0.0
    %267 = vmatprep.subr.mxu0 0.0
    %268 = vmatpush1.msra.mxu0 0.0
    %269 = vmatprep.subr.mxu0 0.0
    %270 = vmatpush1.msra.mxu0 0.0
    %271 = vmatprep.subr.mxu0 0.0
    %272 = vmatpush1.msra.mxu0 0.0
    %273 = vmatprep.subr.mxu0 0.0
    %274 = vmatpush1.msra.mxu0 0.0
    %275 = vmatprep.subr.mxu0 0.0
    %276 = vmatpush1.msra.mxu0 0.0
    %277 = vmatprep.subr.mxu0 0.0
    %278 = vmatpush1.msra.mxu0 0.0
    %279 = vmatprep.subr.mxu0 0.0
    %280 = vmatpush1.msra.mxu0 0.0
    %281 = vmatprep.subr.mxu0 0.0
    %282 = vmatpush1.msra.mxu0 0.0
    %283 = vmatprep.subr.mxu0 0.0
    %284 = vmatpush1.msra.mxu0 0.0
    %285 = vmatprep.subr.mxu0 0.0
    %286 = vmatpush1.msra.mxu0 0.0
    %287 = vmatprep.subr.mxu0 0.0
    %288 = vmatpush1.msra.mxu0 0.0
    %289 = vmatprep.subr.mxu0 0.0
    %290 = vmatpush1.msra.mxu0 0.0
    %291 = vmatprep.subr.mxu0 0.0
    %292 = vmatpush1.msra.mxu0 0.0
    %293 = vmatprep.subr.mxu0 0.0
    %294 = vmatpush1.msra.mxu0 0.0
    %295 = vmatprep.subr.mxu0 0.0
    %296 = vmatpush1.msra.mxu0 0.0
    %297 = vmatprep.subr.mxu0 0.0
    %298 = vmatpush1.msra.mxu0 0.0
    %299 = vmatprep.subr.mxu0 0.0
    %300 = vmatpush1.msra.mxu0 0.0
    %301 = vmatprep.subr.mxu0 0.0
    %302 = vmatpush1.msra.mxu0 0.0
    %303 = vmatprep.subr.mxu0 0.0
    %304 = vmatpush1.msra.mxu0 0.0
    %305 = vmatprep.subr.mxu0 0.0
    %306 = vmatpush1.msra.mxu0 0.0
    %307 = vmatprep.subr.mxu0 0.0
    %308 = vmatpush1.msra.mxu0 0.0
    %309 = vmatprep.subr.mxu0 0.0
    %310 = vmatpush1.msra.mxu0 0.0
    %311 = vmatprep.mubr.f32.mxu0 0.0
    %312 = vmatmul.mubr.f32.gmra.mrb[0].mxu0 %v242
    %v313 = vpop.f32.mrb[0].mxu0
    %v314 = vadd.f32 %v240, %v313
    %v315 = vpop.f32.mrb[0].mxu0
    %316 = vmatprep.mubr.f32.mxu0 0.0
    %317 = vmatmul.mubr.f32.gmra.mrb[0].mxu0 %v245
    %v318 = vpop.f32.mrb[0].mxu0
    %v319 = vadd.f32 %v240, %v318
    %v320 = vpop.f32.mrb[0].mxu0
    %321 = vdwg.mxu0
    %v322 = vmax.f32 %v314, 0.0
    %v323 = vmax.f32 %v319, 0.0
    %s324 = scalar_lea.vmem [#allocation2], 128
    %v325 = vld [vmem:[%s324] sm:$0xff]
    %v326 = vld [vmem:[%s324 + $0x8] sm:$0xff]
    %v327 = vld [vmem:[%s324 + $0x10] sm:$0xff]
    %v328 = vld [vmem:[%s324 + $0x18] sm:$0xff]
    %v329 = vld [vmem:[%s324 + $0x20] sm:$0xff]
    %v330 = vld [vmem:[%s324 + $0x28] sm:$0xff]
    %v331 = vld [vmem:[%s324 + $0x30] sm:$0xff]
    %v332 = vld [vmem:[%s324 + $0x38] sm:$0xff]
    %v333 = vld [vmem:[%s4 + $0x3] sm:$0x1]
    %v334 = vlaneseq
    %v335 = vshrl.u32 %v334, 7
    %v336 = vsub.s32 0, %v335
    %v337 = vrot.slane %v333, %v336
    %v339 = vsel %vm143, %v322, 0
    %v342 = vsel %vm143, %v323, 0
    %344 = vmatprep.subr.mxu0 0.0
    %345 = vmatpush1.msra.mxu0 %v325
    %346 = vmatprep.subr.mxu0 0.0
    %347 = vmatpush1.msra.mxu0 %v326
    %348 = vmatprep.subr.mxu0 0.0
    %349 = vmatpush1.msra.mxu0 %v327
    %350 = vmatprep.subr.mxu0 0.0
    %351 = vmatpush1.msra.mxu0 %v328
    %352 = vmatprep.subr.mxu0 0.0
    %353 = vmatpush1.msra.mxu0 %v329
    %354 = vmatprep.subr.mxu0 0.0
    %355 = vmatpush1.msra.mxu0 %v330
    %356 = vmatprep.subr.mxu0 0.0
    %357 = vmatpush1.msra.mxu0 %v331
    %358 = vmatprep.subr.mxu0 0.0
    %359 = vmatpush1.msra.mxu0 %v332
    %360 = vmatprep.subr.mxu0 0.0
    %361 = vmatpush1.msra.mxu0 0.0
    %362 = vmatprep.subr.mxu0 0.0
    %363 = vmatpush1.msra.mxu0 0.0
    %364 = vmatprep.subr.mxu0 0.0
    %365 = vmatpush1.msra.mxu0 0.0
    %366 = vmatprep.subr.mxu0 0.0
    %367 = vmatpush1.msra.mxu0 0.0
    %368 = vmatprep.subr.mxu0 0.0
    %369 = vmatpush1.msra.mxu0 0.0
    %370 = vmatprep.subr.mxu0 0.0
    %371 = vmatpush1.msra.mxu0 0.0
    %372 = vmatprep.subr.mxu0 0.0
    %373 = vmatpush1.msra.mxu0 0.0
    %374 = vmatprep.subr.mxu0 0.0
    %375 = vmatpush1.msra.mxu0 0.0
    %376 = vmatprep.subr.mxu0 0.0
    %377 = vmatpush1.msra.mxu0 0.0
    %378 = vmatprep.subr.mxu0 0.0
    %379 = vmatpush1.msra.mxu0 0.0
    %380 = vmatprep.subr.mxu0 0.0
    %381 = vmatpush1.msra.mxu0 0.0
    %382 = vmatprep.subr.mxu0 0.0
    %383 = vmatpush1.msra.mxu0 0.0
    %384 = vmatprep.subr.mxu0 0.0
    %385 = vmatpush1.msra.mxu0 0.0
    %386 = vmatprep.subr.mxu0 0.0
    %387 = vmatpush1.msra.mxu0 0.0
    %388 = vmatprep.subr.mxu0 0.0
    %389 = vmatpush1.msra.mxu0 0.0
    %390 = vmatprep.subr.mxu0 0.0
    %391 = vmatpush1.msra.mxu0 0.0
    %392 = vmatprep.subr.mxu0 0.0
    %393 = vmatpush1.msra.mxu0 0.0
    %394 = vmatprep.subr.mxu0 0.0
    %395 = vmatpush1.msra.mxu0 0.0
    %396 = vmatprep.subr.mxu0 0.0
    %397 = vmatpush1.msra.mxu0 0.0
    %398 = vmatprep.subr.mxu0 0.0
    %399 = vmatpush1.msra.mxu0 0.0
    %400 = vmatprep.subr.mxu0 0.0
    %401 = vmatpush1.msra.mxu0 0.0
    %402 = vmatprep.subr.mxu0 0.0
    %403 = vmatpush1.msra.mxu0 0.0
    %404 = vmatprep.subr.mxu0 0.0
    %405 = vmatpush1.msra.mxu0 0.0
    %406 = vmatprep.subr.mxu0 0.0
    %407 = vmatpush1.msra.mxu0 0.0
    %408 = vmatprep.mubr.f32.mxu0 0.0
    %409 = vmatmul.mubr.f32.gmra.mrb[0].mxu0 %v339
    %v410 = vpop.f32.mrb[0].mxu0
    %v411 = vadd.f32 %v337, %v410
    %v412 = vpop.f32.mrb[0].mxu0
    %413 = vmatprep.mubr.f32.mxu0 0.0
    %414 = vmatmul.mubr.f32.gmra.mrb[0].mxu0 %v342
    %v415 = vpop.f32.mrb[0].mxu0
    %v416 = vadd.f32 %v337, %v415
    %v417 = vpop.f32.mrb[0].mxu0
    %418 = vdwg.mxu0
    %v419 = vmax.f32 %v411, 0.0
    %v420 = vmax.f32 %v416, 0.0
    %s421 = scalar_lea.vmem [#allocation2], 192
    %v422 = vld [vmem:[%s421] sm:$0xff]
    %v423 = vld [vmem:[%s421 + $0x8] sm:$0xff]
    %v424 = vld [vmem:[%s421 + $0x10] sm:$0xff]
    %v425 = vld [vmem:[%s421 + $0x18] sm:$0xff]
    %v426 = vld [vmem:[%s421 + $0x20] sm:$0xff]
    %v427 = vld [vmem:[%s421 + $0x28] sm:$0xff]
    %v428 = vld [vmem:[%s421 + $0x30] sm:$0xff]
    %v429 = vld [vmem:[%s421 + $0x38] sm:$0xff]
    %v430 = vld [vmem:[%s4 + $0x4] sm:$0x1]
    %v431 = vlaneseq
    %v432 = vshrl.u32 %v431, 7
    %v433 = vsub.s32 0, %v432
    %v434 = vrot.slane %v430, %v433
    %v436 = vsel %vm143, %v419, 0
    %v439 = vsel %vm143, %v420, 0
    %441 = vmatprep.subr.mxu0 0.0
    %442 = vmatpush1.msra.mxu0 %v422
    %443 = vmatprep.subr.mxu0 0.0
    %444 = vmatpush1.msra.mxu0 %v423
    %445 = vmatprep.subr.mxu0 0.0
    %446 = vmatpush1.msra.mxu0 %v424
    %447 = vmatprep.subr.mxu0 0.0
    %448 = vmatpush1.msra.mxu0 %v425
    %449 = vmatprep.subr.mxu0 0.0
    %450 = vmatpush1.msra.mxu0 %v426
    %451 = vmatprep.subr.mxu0 0.0
    %452 = vmatpush1.msra.mxu0 %v427
    %453 = vmatprep.subr.mxu0 0.0
    %454 = vmatpush1.msra.mxu0 %v428
    %455 = vmatprep.subr.mxu0 0.0
    %456 = vmatpush1.msra.mxu0 %v429
    %457 = vmatprep.subr.mxu0 0.0
    %458 = vmatpush1.msra.mxu0 0.0
    %459 = vmatprep.subr.mxu0 0.0
    %460 = vmatpush1.msra.mxu0 0.0
    %461 = vmatprep.subr.mxu0 0.0
    %462 = vmatpush1.msra.mxu0 0.0
    %463 = vmatprep.subr.mxu0 0.0
    %464 = vmatpush1.msra.mxu0 0.0
    %465 = vmatprep.subr.mxu0 0.0
    %466 = vmatpush1.msra.mxu0 0.0
    %467 = vmatprep.subr.mxu0 0.0
    %468 = vmatpush1.msra.mxu0 0.0
    %469 = vmatprep.subr.mxu0 0.0
    %470 = vmatpush1.msra.mxu0 0.0
    %471 = vmatprep.subr.mxu0 0.0
    %472 = vmatpush1.msra.mxu0 0.0
    %473 = vmatprep.subr.mxu0 0.0
    %474 = vmatpush1.msra.mxu0 0.0
    %475 = vmatprep.subr.mxu0 0.0
    %476 = vmatpush1.msra.mxu0 0.0
    %477 = vmatprep.subr.mxu0 0.0
    %478 = vmatpush1.msra.mxu0 0.0
    %479 = vmatprep.subr.mxu0 0.0
    %480 = vmatpush1.msra.mxu0 0.0
    %481 = vmatprep.subr.mxu0 0.0
    %482 = vmatpush1.msra.mxu0 0.0
    %483 = vmatprep.subr.mxu0 0.0
    %484 = vmatpush1.msra.mxu0 0.0
    %485 = vmatprep.subr.mxu0 0.0
    %486 = vmatpush1.msra.mxu0 0.0
    %487 = vmatprep.subr.mxu0 0.0
    %488 = vmatpush1.msra.mxu0 0.0
    %489 = vmatprep.subr.mxu0 0.0
    %490 = vmatpush1.msra.mxu0 0.0
    %491 = vmatprep.subr.mxu0 0.0
    %492 = vmatpush1.msra.mxu0 0.0
    %493 = vmatprep.subr.mxu0 0.0
    %494 = vmatpush1.msra.mxu0 0.0
    %495 = vmatprep.subr.mxu0 0.0
    %496 = vmatpush1.msra.mxu0 0.0
    %497 = vmatprep.subr.mxu0 0.0
    %498 = vmatpush1.msra.mxu0 0.0
    %499 = vmatprep.subr.mxu0 0.0
    %500 = vmatpush1.msra.mxu0 0.0
    %501 = vmatprep.subr.mxu0 0.0
    %502 = vmatpush1.msra.mxu0 0.0
    %503 = vmatprep.subr.mxu0 0.0
    %504 = vmatpush1.msra.mxu0 0.0
    %505 = vmatprep.mubr.f32.mxu0 0.0
    %506 = vmatmul.mubr.f32.gmra.mrb[0].mxu0 %v436
    %v507 = vpop.f32.mrb[0].mxu0
    %v508 = vadd.f32 %v434, %v507
    %v509 = vpop.f32.mrb[0].mxu0
    %510 = vmatprep.mubr.f32.mxu0 0.0
    %511 = vmatmul.mubr.f32.gmra.mrb[0].mxu0 %v439
    %v512 = vpop.f32.mrb[0].mxu0
    %v513 = vadd.f32 %v434, %v512
    %v514 = vpop.f32.mrb[0].mxu0
    %515 = vdwg.mxu0
    %v516 = vmax.f32 %v508, 0.0
    %v517 = vmax.f32 %v513, 0.0
    %v518 = vld [vmem:[%s3] sm:$0x1]
    %v520 = vlaneseq
    %v521 = vshrl.u32 %v520, 7
    %v522 = vsub.s32 0, %v521
    %v523 = vrot.slane %v518, %v522
    %v525 = vmul.f32 %v516, %v523
    %v526 = vmul.f32 %v517, %v523
    %v527 = vsel %vm143, %v525, 0.0
    %528 = vadd.xlane.f32.xlu0 %v527
    %v529 = vpop.xlane.xlu0 %528
    %v530 = vsel %vm143, %v526, 0.0
    %531 = vadd.xlane.f32.xlu0 %v530
    %v532 = vpop.xlane.xlu0 %531
    %v533 = vld [vmem:[%s4 + $0x5] sm:$0x1]
    %v534 = vlaneseq
    %v535 = vshrl.u32 %v534, 7
    %v536 = vsub.s32 0, %v535
    %v537 = vrot.slane %v533, %v536
    %v538 = vadd.f32 %v529, %v537
    %v539 = vadd.f32 %v532, %v537
    %vm540 = vcmask 7168
    %541 = vst.msk [vmem:[%s5] sm:$0xff] %vm540, %v538
    %542 = vst.msk [vmem:[%s5 + $0x8] sm:$0xff] %vm540, %v539
    // Predicated region
    $region26: #{tpu_custom_call.1} parent=1 // pred_check
      _
    $region27: #{tpu_custom_call.1} parent=1 // pred_check_branch
      %544 = sbr.rel (0) target = $region29
    $region28: #{tpu_custom_call.1} parent=1 // pred_region
      _
    $region29: #{tpu_custom_call.1} parent=1 // pred_fallthru
      _
    // Predicated region
    $region30: #{tpu_custom_call.1} parent=1 // pred_check
      _
    $region31: #{tpu_custom_call.1} parent=1 // pred_check_branch
      %546 = sbr.rel (0) target = $region33
    $region32: #{tpu_custom_call.1} parent=1 // pred_region
      _
    $region33: #{tpu_custom_call.1} parent=1 // pred_fallthru
      _
    %547 = vsyncpa [#allocation3], 1

</llo_original>
